<compile_context>
chip_gen: v5e
topology: v5e:2x2
jax: 0.10.0
libtpu: 0.0.40
codegen_flags: <defaults>
</compile_context>

<pallas_src>
import functools
import numpy as np

import jax
import jax.numpy as jnp
from jax.experimental import pallas as pl
from jax.experimental.pallas import tpu as pltpu

LOGC = float(np.log(2.0 * np.pi))
BN_EPS = 1e-5


def _vmem():
    return pl.BlockSpec(memory_space=pltpu.MemorySpace.VMEM)


# --------------------- K1: conv + ReLU + global avg pool ---------------------

def _conv_pool_kernel(xp_ref, w_ref, b_ref, o_ref, *, H, W, CIN, DIM):
    acc = jnp.zeros((H * W, DIM), jnp.float32)
    k = 0
    for dy in range(3):
        for dx in range(3):
            pat = xp_ref[0, dy:dy + H, dx:dx + W, :].reshape(H * W, CIN)
            acc = acc + jnp.dot(pat, w_ref[k], preferred_element_type=jnp.float32)
            k += 1
    acc = jnp.maximum(acc + b_ref[...], 0.0)              # conv bias + ReLU
    o_ref[0] = jnp.mean(acc, axis=0, keepdims=True)       # global average pool


def base_network(params, x_nchw):
    n, c, h, w = x_nchw.shape
    dim = params["conv_w"].shape[-1]
    xp = jnp.pad(x_nchw, ((0, 0), (0, 0), (1, 1), (1, 1)))
    xp = jnp.transpose(xp, (0, 2, 3, 1))                  # [N, H+2, W+2, C] (NHWC)
    out = pl.pallas_call(
        functools.partial(_conv_pool_kernel, H=h, W=w, CIN=c, DIM=dim),
        out_shape=jax.ShapeDtypeStruct((n, 1, dim), jnp.float32),
        grid=(n,),
        in_specs=[
            pl.BlockSpec((1, h + 2, w + 2, c), lambda i: (i, 0, 0, 0)),
            pl.BlockSpec((9, c, dim), lambda i: (0, 0, 0)),
            pl.BlockSpec((1, dim), lambda i: (0, 0)),
        ],
        out_specs=pl.BlockSpec((1, 1, dim), lambda i: (i, 0, 0)),
        compiler_params=pltpu.CompilerParams(dimension_semantics=("parallel",)),
    )(xp, params["conv_w"], params["conv_b"])
    return out.reshape(n, dim)


# ----------- K2: bottleneck(Linear+BN+ReLU) + classifier + softmax -----------

def _bneck_cls_kernel(f_ref, bw, bb, g, bt, cw1, cb1, cw2, cb2,
                      sh_ref, th_ref, slog_ref, ps_ref, *, ns):
    h = jnp.dot(f_ref[...], bw[...], preferred_element_type=jnp.float32) + bb[...]

    def bn_relu(xv):     # BatchNorm1d (batch stats, biased var) + ReLU; Dropout -> identity
        m = jnp.mean(xv, axis=0, keepdims=True)
        v = jnp.mean(jnp.square(xv - m), axis=0, keepdims=True)
        return jnp.maximum((xv - m) * jax.lax.rsqrt(v + BN_EPS) * g[...] + bt[...], 0.0)

    hs = bn_relu(h[:ns])          # source group: its own batch statistics
    ht = bn_relu(h[ns:])          # target group: its own batch statistics
    sh_ref[...] = hs
    th_ref[...] = ht

    def classify(hv):             # Linear -> ReLU -> (Dropout=id) -> Linear
        c1 = jnp.maximum(jnp.dot(hv, cw1[...], preferred_element_type=jnp.float32) + cb1[...], 0.0)
        return jnp.dot(c1, cw2[...], preferred_element_type=jnp.float32) + cb2[...]

    slog_ref[...] = classify(hs)                          # source logits (for CE)
    lt = classify(ht)                                     # target logits -> softmax
    mm = jnp.max(lt, axis=1, keepdims=True)
    e = jnp.exp(lt - mm)
    ps_ref[...] = e / jnp.sum(e, axis=1, keepdims=True)


def bottleneck_classifier(params, feats, ns_tot):
    n, _ = feats.shape
    nt = n - ns_tot
    hid = params["bneck_w"].shape[1]
    ncls = params["cls_w2"].shape[1]
    return pl.pallas_call(
        functools.partial(_bneck_cls_kernel, ns=ns_tot),
        out_shape=(jax.ShapeDtypeStruct((ns_tot, hid), jnp.float32),
                   jax.ShapeDtypeStruct((nt, hid), jnp.float32),
                   jax.ShapeDtypeStruct((ns_tot, ncls), jnp.float32),
                   jax.ShapeDtypeStruct((nt, ncls), jnp.float32)),
        in_specs=[_vmem()] * 9,
        out_specs=(_vmem(), _vmem(), _vmem(), _vmem()),
    )(feats, params["bneck_w"], params["bneck_b"], params["bn_gamma"], params["bn_beta"],
      params["cls_w1"], params["cls_b1"], params["cls_w2"], params["cls_b2"])


# ------- K3 (per domain): VAE (labelled + batched unlabelled + all_z) --------
# -------            + discriminator + class/domain cross-entropy      --------

def _domain_kernel(xe_ref, ye_ref, eps_ref, wrow_ref, logq_ref, slog_ref, domy_ref,
                   exm, exl, eym, eyl, ebm, ebl,
                   dxym, dxys, dxzm, dxzs, dxbm, dxbs,
                   dym, dys, dybm, dybs,
                   dw1, db1, dw2, db2, dw3, db3,
                   out_ref, *, ns, na):
    f32 = jnp.float32
    x = xe_ref[...]                                  # [NE, hidden]
    y = ye_ref[...]                                  # [NE, C]

    # encoder_z: Linear([x, y]) split into x/y input blocks and mu/logsigma halves
    mu = (jnp.dot(x, exm[...], preferred_element_type=f32)
          + jnp.dot(y, eym[...], preferred_element_type=f32) + ebm[...])
    ls = (jnp.dot(x, exl[...], preferred_element_type=f32)
          + jnp.dot(y, eyl[...], preferred_element_type=f32) + ebl[...])
    z = mu + jnp.exp(0.5 * ls) * eps_ref[...]

    # decoder_x: Linear([y, z]) split into y/z input blocks and mu/sigma halves
    xr_mu = (jnp.dot(y, dxym[...], preferred_element_type=f32)
             + jnp.dot(z, dxzm[...], preferred_element_type=f32) + dxbm[...])
    xr_ls = (jnp.dot(y, dxys[...], preferred_element_type=f32)
             + jnp.dot(z, dxzs[...], preferred_element_type=f32) + dxbs[...])
    # decoder_y
    yr_mu = jnp.dot(z, dym[...], preferred_element_type=f32) + dybm[...]
    yr_ls = jnp.dot(z, dys[...], preferred_element_type=f32) + dybs[...]

    def neg_mean_logpdf(v, m, l):
        lp = -0.5 * LOGC - 0.5 * l - jnp.square(v - m) / (2.0 * jnp.exp(l))
        return -jnp.mean(lp, axis=1, keepdims=True)

    t1 = neg_mean_logpdf(x, xr_mu, xr_ls)
    t2 = neg_mean_logpdf(y, yr_mu, yr_ls)
    marg = -0.5 * (LOGC + jnp.square(mu) + jnp.exp(ls))
    t3 = -jnp.mean(marg, axis=1, keepdims=True)
    ent = -0.5 * (LOGC + 1.0 + ls)
    t4 = jnp.mean(ent, axis=1, keepdims=True)
    L = t1 + t2 + t3 + t4                                        # [NE, 1]

    # vae_loss = mean(labelled L) + sum_l mean_t q*(L_u - log q)  (row weights)
    vae = jnp.sum(wrow_ref[...] * (L - logq_ref[...]), axis=0, keepdims=True)   # [1,1]

    # discriminator on all_z rows (ReverseLayerF.forward == identity)
    z_all = z[na:]
    h1 = jnp.maximum(jnp.dot(z_all, dw1[...], preferred_element_type=f32) + db1[...], 0.0)
    h2 = jnp.maximum(jnp.dot(h1, dw2[...], preferred_element_type=f32) + db2[...], 0.0)
    dl = jnp.dot(h2, dw3[...], preferred_element_type=f32) + db3[...]           # [Ns+Nt, 2]
    dm = jnp.max(dl, axis=1, keepdims=True)
    dlse = dm + jnp.log(jnp.sum(jnp.exp(dl - dm), axis=1, keepdims=True))
    dom_nll = dlse - jnp.sum(domy_ref[...] * dl, axis=1, keepdims=True)
    dom_loss = jnp.mean(dom_nll, axis=0, keepdims=True)                         # [1,1]

    # classification cross-entropy for this domain's source rows
    sl = slog_ref[...]
    sm = jnp.max(sl, axis=1, keepdims=True)
    slse = sm + jnp.log(jnp.sum(jnp.exp(sl - sm), axis=1, keepdims=True))
    cls_nll = slse - jnp.sum(y[:ns] * sl, axis=1, keepdims=True)
    cls_loss = jnp.mean(cls_nll, axis=0, keepdims=True)                         # [1,1]

    out_ref[...] = cls_loss + dom_loss + 0.1 * vae


def domain_loss_fused(params, xe, ye, eps, wrow, logq, s_logits, dom_y, *, ns, na):
    out = pl.pallas_call(
        functools.partial(_domain_kernel, ns=ns, na=na),
        out_shape=jax.ShapeDtypeStruct((1, 1), jnp.float32),
        in_specs=[_vmem()] * 29,
        out_specs=_vmem(),
    )(xe, ye, eps, wrow, logq, s_logits, dom_y,
      params["enc_wx_mu"], params["enc_wx_ls"], params["enc_wy_mu"], params["enc_wy_ls"],
      params["enc_b_mu"], params["enc_b_ls"],
      params["decx_wy_mu"], params["decx_wy_sg"], params["decx_wz_mu"], params["decx_wz_sg"],
      params["decx_b_mu"], params["decx_b_sg"],
      params["decy_w_mu"], params["decy_w_sg"], params["decy_b_mu"], params["decy_b_sg"],
      params["disc_w1"], params["disc_b1"], params["disc_w2"], params["disc_b2"],
      params["disc_w3"], params["disc_b3"])
    return out[0, 0]


# ------------------------------ parameters -----------------------------------

def init_params(key, in_ch, dim, hidden, width, num_classes, dim_z):
    ks = iter(jax.random.split(key, 40))

    def w(shape):
        return jax.random.normal(next(ks), shape, jnp.float32) * 0.05

    p = {}
    # base network stand-in: 3x3 conv (in_ch -> dim), per-tap weights [9, in_ch, dim]
    p["conv_w"] = w((9, in_ch, dim)); p["conv_b"] = w((1, dim))
    # bottleneck: Linear(dim, hidden) + BN(hidden) + ReLU (+Dropout=id)
    p["bneck_w"] = w((dim, hidden)); p["bneck_b"] = w((1, hidden))
    p["bn_gamma"] = jnp.ones((1, hidden), jnp.float32)
    p["bn_beta"] = jnp.zeros((1, hidden), jnp.float32)
    # classifier: Linear(hidden, width) ReLU Linear(width, C)
    p["cls_w1"] = w((hidden, width)); p["cls_b1"] = w((1, width))
    p["cls_w2"] = w((width, num_classes)); p["cls_b2"] = w((1, num_classes))
    # discriminator: Linear(Z,width) ReLU Linear(width,width) ReLU Linear(width,2)
    p["disc_w1"] = w((dim_z, width)); p["disc_b1"] = w((1, width))
    p["disc_w2"] = w((width, width)); p["disc_b2"] = w((1, width))
    p["disc_w3"] = w((width, 2)); p["disc_b3"] = w((1, 2))
    # encoder_z: Linear(hidden + C, 2*Z); input rows split [x | y], output cols split [mu | logsigma]
    p["enc_wx_mu"] = w((hidden, dim_z)); p["enc_wx_ls"] = w((hidden, dim_z))
    p["enc_wy_mu"] = w((num_classes, dim_z)); p["enc_wy_ls"] = w((num_classes, dim_z))
    p["enc_b_mu"] = w((1, dim_z)); p["enc_b_ls"] = w((1, dim_z))
    # decoder_x: Linear(C + Z, 2*hidden); input rows split [y | z] (torch.cat([y, z]) order)
    p["decx_wy_mu"] = w((num_classes, hidden)); p["decx_wy_sg"] = w((num_classes, hidden))
    p["decx_wz_mu"] = w((dim_z, hidden)); p["decx_wz_sg"] = w((dim_z, hidden))
    p["decx_b_mu"] = w((1, hidden)); p["decx_b_sg"] = w((1, hidden))
    # decoder_y: Linear(Z, 2*C)
    p["decy_w_mu"] = w((dim_z, num_classes)); p["decy_w_sg"] = w((dim_z, num_classes))
    p["decy_b_mu"] = w((1, num_classes)); p["decy_b_sg"] = w((1, num_classes))
    return p


# ------------------------------- forward -------------------------------------

def translate_forward(params, s_inputs, s_outputs, t_inputs, alpha, key, *,
                      num_classes, dim_z, use_bottleneck=True, mu=1.0):
    del alpha  # ReverseLayerF.forward is identity; alpha only flips gradients in backward
    assert use_bottleneck, "only the use_bottleneck=True path is implemented"
    n_dom = len(s_inputs)
    ns_list = [x.shape[0] for x in s_inputs]
    ns_tot = sum(ns_list)
    nt = t_inputs.shape[0]
    C, Z = num_classes, dim_z

    # one conv+pool launch over all images (source domains + target concatenated)
    all_imgs = jnp.concatenate(list(s_inputs) + [t_inputs], axis=0)
    feats = base_network(params, all_imgs)                          # [ns_tot + nt, dim]

    # one fused bottleneck+classifier launch (classifier computed once, reused per domain)
    s_hid, t_hid, s_logits_all, psudo = bottleneck_classifier(params, feats, ns_tot)

    # shared unlabelled stacks, label-major: rows [l*nt:(l+1)*nt] carry label l
    x_u = jnp.tile(t_hid, (C, 1))                                   # [nt*C, hidden]
    y_u = jnp.repeat(jnp.eye(C, dtype=jnp.float32), nt, axis=0)     # [nt*C, C]
    q = jnp.transpose(psudo).reshape(nt * C, 1)                     # q[l*nt+t] = psudo[t, l]
    logq_u = jnp.log(jnp.maximum(q, 1e-12))                         # guard q->0 (0*log0 -> 0)

    keys = jax.random.split(key, n_dom)
    loss = 0.0
    off = 0
    for i in range(n_dom):
        ns = ns_list[i]
        x_s = s_hid[off:off + ns]
        s_logits = s_logits_all[off:off + ns]
        y_s = jax.nn.one_hot(s_outputs[i], C, dtype=jnp.float32)

        # stacked encoder batch: [labelled | unlabelled(all labels) | all_z rows]
        xe = jnp.concatenate([x_s, x_u, x_s, t_hid], axis=0)
        ye = jnp.concatenate([y_s, y_u, y_s, psudo], axis=0)
        ne = ns + nt * C + ns + nt
        eps = jax.random.normal(keys[i], (ne, Z), jnp.float32)
        wrow = jnp.concatenate([jnp.full((ns, 1), 1.0 / ns, jnp.float32),
                                q / nt,
                                jnp.zeros((ns + nt, 1), jnp.float32)], axis=0)
        logq = jnp.concatenate([jnp.zeros((ns, 1), jnp.float32),
                                logq_u,
                                jnp.zeros((ns + nt, 1), jnp.float32)], axis=0)
        dom_y = jnp.concatenate([jnp.tile(jnp.array([[1.0, 0.0]], jnp.float32), (ns, 1)),
                                 jnp.tile(jnp.array([[0.0, 1.0]], jnp.float32), (nt, 1))],
                                axis=0)

        loss_i = domain_loss_fused(params, xe, ye, eps, wrow, logq, s_logits, dom_y,
                                   ns=ns, na=ns + nt * C)
        loss = loss + loss_i * (mu ** (n_dom - i - 1))
        off += ns
    return loss / n_dom


# --------------------------------- main ---------------------------------------

if __name__ == "__main__":
    num_classes = 4
    in_ch = 3
    dim = 128      # stand-in for resnet18's 512 feature dim (lane-dense)
    hidden = 128   # stand-in for bottleneck_width=256
    width = 128    # stand-in for width=1024
    dim_z = 128    # stand-in for 2048

    root = jax.random.PRNGKey(0)
    kp, kd1, kd2, kd3, kl1, kl2, kn = jax.random.split(root, 7)

    params = init_params(kp, in_ch, dim, hidden, width, num_classes, dim_z)

    s_inputs = [jax.random.normal(kd1, (2, in_ch, 8, 8), jnp.float32),
                jax.random.normal(kd2, (2, in_ch, 8, 8), jnp.float32)]
    s_outputs = [jax.random.randint(kl1, (2,), 0, num_classes),
                 jax.random.randint(kl2, (2,), 0, num_classes)]
    t_inputs = jax.random.normal(kd3, (2, in_ch, 8, 8), jnp.float32)
    alpha = 0.1

    loss = translate_forward(params, s_inputs, s_outputs, t_inputs, alpha, kn,
                             num_classes=num_classes, dim_z=dim_z)
    loss = jax.block_until_ready(loss)
    assert bool(jnp.isfinite(loss))
    print("KERNEL_OK")
</pallas_src>

<mosaic_0001>
module attributes {stable_mosaic.version = 11 : i64} {
  func.func @_conv_pool_kernel(%arg0: i32, %arg1: memref<1x10x10x3xf32, #tpu.memory_space<vmem>>, %arg2: memref<9x3x128xf32, #tpu.memory_space<vmem>>, %arg3: memref<1x128xf32, #tpu.memory_space<vmem>>, %arg4: memref<1x1x128xf32, #tpu.memory_space<vmem>>) attributes {dimension_semantics = [#tpu.dimension_semantics<parallel>], iteration_bounds = array<i64: 6>, scalar_prefetch = 0 : i64, scratch_operands = 0 : i64, tpu.core_type = #tpu.core_type<tc>, window_params = [{transform_indices = @transform_0, window_bounds = array<i64: 1, 10, 10, 3>}, {pipeline_mode = #tpu.pipeline_mode<synchronous>, transform_indices = @transform_1, window_bounds = array<i64: 9, 3, 128>}, {pipeline_mode = #tpu.pipeline_mode<synchronous>, transform_indices = @transform_2, window_bounds = array<i64: 1, 128>}, {transform_indices = @transform_3, window_bounds = array<i64: 1, 1, 128>}]} {
    %cst = arith.constant 0.000000e+00 : f32
    %0 = vector.broadcast %cst : f32 to vector<64x128xf32>
    %c0 = arith.constant 0 : index
    %c0_0 = arith.constant 0 : index
    %c0_1 = arith.constant 0 : index
    %c0_2 = arith.constant 0 : index
    %1 = vector.load %arg1[%c0, %c0_0, %c0_1, %c0_2] : memref<1x10x10x3xf32, #tpu.memory_space<vmem>>, vector<1x8x8x3xf32>
    %2 = vector.shape_cast %1 : vector<1x8x8x3xf32> to vector<8x8x3xf32>
    %3 = vector.shape_cast %2 : vector<8x8x3xf32> to vector<64x3xf32>
    %c0_3 = arith.constant 0 : index
    %c0_4 = arith.constant 0 : index
    %c0_5 = arith.constant 0 : index
    %4 = vector.load %arg2[%c0_3, %c0_4, %c0_5] : memref<9x3x128xf32, #tpu.memory_space<vmem>>, vector<1x3x128xf32>
    %5 = vector.shape_cast %4 : vector<1x3x128xf32> to vector<3x128xf32>
    %cst_6 = arith.constant dense<0.000000e+00> : vector<64x128xf32>
    %6 = tpu.matmul %3, %5, %cst_6 {dimension_numbers = #tpu.dot_dimension_numbers<[1], [0], [0], [1], [0, 0, 1, 1], [], []>} : vector<64x3xf32>, vector<3x128xf32>, vector<64x128xf32> -> vector<64x128xf32>
    %7 = arith.addf %0, %6 : vector<64x128xf32>
    %c0_7 = arith.constant 0 : index
    %c0_8 = arith.constant 0 : index
    %c1 = arith.constant 1 : index
    %c0_9 = arith.constant 0 : index
    %8 = vector.load %arg1[%c0_7, %c0_8, %c1, %c0_9] : memref<1x10x10x3xf32, #tpu.memory_space<vmem>>, vector<1x8x8x3xf32>
    %9 = vector.shape_cast %8 : vector<1x8x8x3xf32> to vector<8x8x3xf32>
    %10 = vector.shape_cast %9 : vector<8x8x3xf32> to vector<64x3xf32>
    %c1_10 = arith.constant 1 : index
    %c0_11 = arith.constant 0 : index
    %c0_12 = arith.constant 0 : index
    %11 = vector.load %arg2[%c1_10, %c0_11, %c0_12] : memref<9x3x128xf32, #tpu.memory_space<vmem>>, vector<1x3x128xf32>
    %12 = vector.shape_cast %11 : vector<1x3x128xf32> to vector<3x128xf32>
    %cst_13 = arith.constant dense<0.000000e+00> : vector<64x128xf32>
    %13 = tpu.matmul %10, %12, %cst_13 {dimension_numbers = #tpu.dot_dimension_numbers<[1], [0], [0], [1], [0, 0, 1, 1], [], []>} : vector<64x3xf32>, vector<3x128xf32>, vector<64x128xf32> -> vector<64x128xf32>
    %14 = arith.addf %7, %13 : vector<64x128xf32>
    %c0_14 = arith.constant 0 : index
    %c0_15 = arith.constant 0 : index
    %c2 = arith.constant 2 : index
    %c0_16 = arith.constant 0 : index
    %15 = vector.load %arg1[%c0_14, %c0_15, %c2, %c0_16] : memref<1x10x10x3xf32, #tpu.memory_space<vmem>>, vector<1x8x8x3xf32>
    %16 = vector.shape_cast %15 : vector<1x8x8x3xf32> to vector<8x8x3xf32>
    %17 = vector.shape_cast %16 : vector<8x8x3xf32> to vector<64x3xf32>
    %c2_17 = arith.constant 2 : index
    %c0_18 = arith.constant 0 : index
    %c0_19 = arith.constant 0 : index
    %18 = vector.load %arg2[%c2_17, %c0_18, %c0_19] : memref<9x3x128xf32, #tpu.memory_space<vmem>>, vector<1x3x128xf32>
    %19 = vector.shape_cast %18 : vector<1x3x128xf32> to vector<3x128xf32>
    %cst_20 = arith.constant dense<0.000000e+00> : vector<64x128xf32>
    %20 = tpu.matmul %17, %19, %cst_20 {dimension_numbers = #tpu.dot_dimension_numbers<[1], [0], [0], [1], [0, 0, 1, 1], [], []>} : vector<64x3xf32>, vector<3x128xf32>, vector<64x128xf32> -> vector<64x128xf32>
    %21 = arith.addf %14, %20 : vector<64x128xf32>
    %c0_21 = arith.constant 0 : index
    %c1_22 = arith.constant 1 : index
    %c0_23 = arith.constant 0 : index
    %c0_24 = arith.constant 0 : index
    %22 = vector.load %arg1[%c0_21, %c1_22, %c0_23, %c0_24] : memref<1x10x10x3xf32, #tpu.memory_space<vmem>>, vector<1x8x8x3xf32>
    %23 = vector.shape_cast %22 : vector<1x8x8x3xf32> to vector<8x8x3xf32>
    %24 = vector.shape_cast %23 : vector<8x8x3xf32> to vector<64x3xf32>
    %c3 = arith.constant 3 : index
    %c0_25 = arith.constant 0 : index
    %c0_26 = arith.constant 0 : index
    %25 = vector.load %arg2[%c3, %c0_25, %c0_26] : memref<9x3x128xf32, #tpu.memory_space<vmem>>, vector<1x3x128xf32>
    %26 = vector.shape_cast %25 : vector<1x3x128xf32> to vector<3x128xf32>
    %cst_27 = arith.constant dense<0.000000e+00> : vector<64x128xf32>
    %27 = tpu.matmul %24, %26, %cst_27 {dimension_numbers = #tpu.dot_dimension_numbers<[1], [0], [0], [1], [0, 0, 1, 1], [], []>} : vector<64x3xf32>, vector<3x128xf32>, vector<64x128xf32> -> vector<64x128xf32>
    %28 = arith.addf %21, %27 : vector<64x128xf32>
    %c0_28 = arith.constant 0 : index
    %c1_29 = arith.constant 1 : index
    %c1_30 = arith.constant 1 : index
    %c0_31 = arith.constant 0 : index
    %29 = vector.load %arg1[%c0_28, %c1_29, %c1_30, %c0_31] : memref<1x10x10x3xf32, #tpu.memory_space<vmem>>, vector<1x8x8x3xf32>
    %30 = vector.shape_cast %29 : vector<1x8x8x3xf32> to vector<8x8x3xf32>
    %31 = vector.shape_cast %30 : vector<8x8x3xf32> to vector<64x3xf32>
    %c4 = arith.constant 4 : index
    %c0_32 = arith.constant 0 : index
    %c0_33 = arith.constant 0 : index
    %32 = vector.load %arg2[%c4, %c0_32, %c0_33] : memref<9x3x128xf32, #tpu.memory_space<vmem>>, vector<1x3x128xf32>
    %33 = vector.shape_cast %32 : vector<1x3x128xf32> to vector<3x128xf32>
    %cst_34 = arith.constant dense<0.000000e+00> : vector<64x128xf32>
    %34 = tpu.matmul %31, %33, %cst_34 {dimension_numbers = #tpu.dot_dimension_numbers<[1], [0], [0], [1], [0, 0, 1, 1], [], []>} : vector<64x3xf32>, vector<3x128xf32>, vector<64x128xf32> -> vector<64x128xf32>
    %35 = arith.addf %28, %34 : vector<64x128xf32>
    %c0_35 = arith.constant 0 : index
    %c1_36 = arith.constant 1 : index
    %c2_37 = arith.constant 2 : index
    %c0_38 = arith.constant 0 : index
    %36 = vector.load %arg1[%c0_35, %c1_36, %c2_37, %c0_38] : memref<1x10x10x3xf32, #tpu.memory_space<vmem>>, vector<1x8x8x3xf32>
    %37 = vector.shape_cast %36 : vector<1x8x8x3xf32> to vector<8x8x3xf32>
    %38 = vector.shape_cast %37 : vector<8x8x3xf32> to vector<64x3xf32>
    %c5 = arith.constant 5 : index
    %c0_39 = arith.constant 0 : index
    %c0_40 = arith.constant 0 : index
    %39 = vector.load %arg2[%c5, %c0_39, %c0_40] : memref<9x3x128xf32, #tpu.memory_space<vmem>>, vector<1x3x128xf32>
    %40 = vector.shape_cast %39 : vector<1x3x128xf32> to vector<3x128xf32>
    %cst_41 = arith.constant dense<0.000000e+00> : vector<64x128xf32>
    %41 = tpu.matmul %38, %40, %cst_41 {dimension_numbers = #tpu.dot_dimension_numbers<[1], [0], [0], [1], [0, 0, 1, 1], [], []>} : vector<64x3xf32>, vector<3x128xf32>, vector<64x128xf32> -> vector<64x128xf32>
    %42 = arith.addf %35, %41 : vector<64x128xf32>
    %c0_42 = arith.constant 0 : index
    %c2_43 = arith.constant 2 : index
    %c0_44 = arith.constant 0 : index
    %c0_45 = arith.constant 0 : index
    %43 = vector.load %arg1[%c0_42, %c2_43, %c0_44, %c0_45] : memref<1x10x10x3xf32, #tpu.memory_space<vmem>>, vector<1x8x8x3xf32>
    %44 = vector.shape_cast %43 : vector<1x8x8x3xf32> to vector<8x8x3xf32>
    %45 = vector.shape_cast %44 : vector<8x8x3xf32> to vector<64x3xf32>
    %c6 = arith.constant 6 : index
    %c0_46 = arith.constant 0 : index
    %c0_47 = arith.constant 0 : index
    %46 = vector.load %arg2[%c6, %c0_46, %c0_47] : memref<9x3x128xf32, #tpu.memory_space<vmem>>, vector<1x3x128xf32>
    %47 = vector.shape_cast %46 : vector<1x3x128xf32> to vector<3x128xf32>
    %cst_48 = arith.constant dense<0.000000e+00> : vector<64x128xf32>
    %48 = tpu.matmul %45, %47, %cst_48 {dimension_numbers = #tpu.dot_dimension_numbers<[1], [0], [0], [1], [0, 0, 1, 1], [], []>} : vector<64x3xf32>, vector<3x128xf32>, vector<64x128xf32> -> vector<64x128xf32>
    %49 = arith.addf %42, %48 : vector<64x128xf32>
    %c0_49 = arith.constant 0 : index
    %c2_50 = arith.constant 2 : index
    %c1_51 = arith.constant 1 : index
    %c0_52 = arith.constant 0 : index
    %50 = vector.load %arg1[%c0_49, %c2_50, %c1_51, %c0_52] : memref<1x10x10x3xf32, #tpu.memory_space<vmem>>, vector<1x8x8x3xf32>
    %51 = vector.shape_cast %50 : vector<1x8x8x3xf32> to vector<8x8x3xf32>
    %52 = vector.shape_cast %51 : vector<8x8x3xf32> to vector<64x3xf32>
    %c7 = arith.constant 7 : index
    %c0_53 = arith.constant 0 : index
    %c0_54 = arith.constant 0 : index
    %53 = vector.load %arg2[%c7, %c0_53, %c0_54] : memref<9x3x128xf32, #tpu.memory_space<vmem>>, vector<1x3x128xf32>
    %54 = vector.shape_cast %53 : vector<1x3x128xf32> to vector<3x128xf32>
    %cst_55 = arith.constant dense<0.000000e+00> : vector<64x128xf32>
    %55 = tpu.matmul %52, %54, %cst_55 {dimension_numbers = #tpu.dot_dimension_numbers<[1], [0], [0], [1], [0, 0, 1, 1], [], []>} : vector<64x3xf32>, vector<3x128xf32>, vector<64x128xf32> -> vector<64x128xf32>
    %56 = arith.addf %49, %55 : vector<64x128xf32>
    %c0_56 = arith.constant 0 : index
    %c2_57 = arith.constant 2 : index
    %c2_58 = arith.constant 2 : index
    %c0_59 = arith.constant 0 : index
    %57 = vector.load %arg1[%c0_56, %c2_57, %c2_58, %c0_59] : memref<1x10x10x3xf32, #tpu.memory_space<vmem>>, vector<1x8x8x3xf32>
    %58 = vector.shape_cast %57 : vector<1x8x8x3xf32> to vector<8x8x3xf32>
    %59 = vector.shape_cast %58 : vector<8x8x3xf32> to vector<64x3xf32>
    %c8 = arith.constant 8 : index
    %c0_60 = arith.constant 0 : index
    %c0_61 = arith.constant 0 : index
    %60 = vector.load %arg2[%c8, %c0_60, %c0_61] : memref<9x3x128xf32, #tpu.memory_space<vmem>>, vector<1x3x128xf32>
    %61 = vector.shape_cast %60 : vector<1x3x128xf32> to vector<3x128xf32>
    %cst_62 = arith.constant dense<0.000000e+00> : vector<64x128xf32>
    %62 = tpu.matmul %59, %61, %cst_62 {dimension_numbers = #tpu.dot_dimension_numbers<[1], [0], [0], [1], [0, 0, 1, 1], [], []>} : vector<64x3xf32>, vector<3x128xf32>, vector<64x128xf32> -> vector<64x128xf32>
    %63 = arith.addf %56, %62 : vector<64x128xf32>
    %c0_63 = arith.constant 0 : index
    %c0_64 = arith.constant 0 : index
    %64 = vector.load %arg3[%c0_63, %c0_64] : memref<1x128xf32, #tpu.memory_space<vmem>>, vector<1x128xf32>
    %65 = vector.broadcast %64 : vector<1x128xf32> to vector<64x128xf32>
    %66 = arith.addf %63, %65 : vector<64x128xf32>
    %cst_65 = arith.constant 0.000000e+00 : f32
    %67 = vector.broadcast %cst_65 : f32 to vector<64x128xf32>
    %68 = arith.maximumf %66, %67 : vector<64x128xf32>
    %cst_66 = arith.constant dense<0.000000e+00> : vector<128xf32>
    %69 = vector.multi_reduction <add>, %68, %cst_66 [0] : vector<64x128xf32> to vector<128xf32>
    %70 = vector.shape_cast %69 : vector<128xf32> to vector<1x128xf32>
    %cst_67 = arith.constant 6.400000e+01 : f32
    %71 = vector.broadcast %cst_67 : f32 to vector<1x128xf32>
    %72 = arith.divf %70, %71 : vector<1x128xf32>
    %c0_68 = arith.constant 0 : index
    %c0_69 = arith.constant 0 : index
    %c0_70 = arith.constant 0 : index
    %73 = vector.load %arg4[%c0_68, %c0_69, %c0_70] : memref<1x1x128xf32, #tpu.memory_space<vmem>>, vector<1x1x128xf32>
    %74 = vector.shape_cast %73 : vector<1x1x128xf32> to vector<1x128xf32>
    %75 = vector.shape_cast %72 : vector<1x128xf32> to vector<1x1x128xf32>
    tpu.vector_store %arg4[%c0_68, %c0_69, %c0_70], %75 {strides = array<i32>} : memref<1x1x128xf32, #tpu.memory_space<vmem>>, vector<1x1x128xf32>,
    return
  }
  func.func @transform_0(%arg0: i32) -> (i32, i32, i32, i32) {
    %c0_i32 = arith.constant 0 : i32
    %c0_i32_0 = arith.constant 0 : i32
    %c0_i32_1 = arith.constant 0 : i32
    %c0_i32_2 = arith.constant 0 : i32
    return %arg0, %c0_i32, %c0_i32_0, %c0_i32_1 : i32, i32, i32, i32
  }
  func.func @transform_1(%arg0: i32) -> (i32, i32, i32) {
    %c0_i32 = arith.constant 0 : i32
    %c0_i32_0 = arith.constant 0 : i32
    %c0_i32_1 = arith.constant 0 : i32
    %c0_i32_2 = arith.constant 0 : i32
    return %c0_i32, %c0_i32_0, %c0_i32_1 : i32, i32, i32
  }
  func.func @transform_2(%arg0: i32) -> (i32, i32) {
    %c0_i32 = arith.constant 0 : i32
    %c0_i32_0 = arith.constant 0 : i32
    %c0_i32_1 = arith.constant 0 : i32
    return %c0_i32, %c0_i32_0 : i32, i32
  }
  func.func @transform_3(%arg0: i32) -> (i32, i32, i32) {
    %c0_i32 = arith.constant 0 : i32
    %c0_i32_0 = arith.constant 0 : i32
    %c0_i32_1 = arith.constant 0 : i32
    return %arg0, %c0_i32, %c0_i32_0 : i32, i32, i32
  }
}

</mosaic_0001>

<llo_original>
// kernel: tpu_custom_call.1
$region0: #{tpu_custom_call.1}
  #allocation0 [shape = 'u32[]', space=smem, size = 0x4, offset = 0x4, fixed_abs, tag = 'smem constant byte address 0x4 - core index']
  #allocation1 [shape = 'u32[72,128]{1,0:T(1,128)}', space=vmem, size = 0x9000, scoped, tag = 'internal scratch']
  %s0 = inlined_call_operand.vmem [shape: f32[6,10,10,3], index: 0, kind: input, shape index: {}]
  %s1 = inlined_call_operand.vmem [shape: f32[9,3,128], index: 1, kind: input, shape index: {}]
  %s2 = inlined_call_operand.vmem [shape: f32[1,128], index: 2, kind: input, shape index: {}]
  %s3 = inlined_call_operand.hbm [shape: f32[6,1,128], index: 3, kind: output, shape index: {}]
  %s4 = sld [smem:[#allocation0]]
  $region45: #{tpu_custom_call.1} parent=0
    _
  %s6 = ssub.s32 1, %s4
  %s7 = scalar_select 0, %s6, %s4
  $region1: #{tpu_custom_call.1} parent=0
    #allocation2 [shape = 'u8[1024]{0}', space=vmem, size = 0x400, scoped, tag = 'output window, operand 0']
    #allocation3 [shape = 's32[2]{0}', space=sflag, size = 0x8, scoped, tag = 'scoped memory for tpu_custom_call.1']
    %8 = vsyncpa [#allocation3], 0
    %s9 = scalar_lea.sflag [#allocation3], 1
    %10 = vsyncpa %s9, 0
    loop: start=0, step=1, limit=8
    $region2: #{tpu_custom_call.1} parent=1 // loop_pre_header
      _
    $region3: #{tpu_custom_call.1} parent=1 // loop_header
      %s12 = sphi 0, %s16
      %p13 = scmp.ge.s32.totalorder %s12, 8
      %s22 = sphi 0, %s24
      %s25 = sphi 0, %s22
      %s26 = sphi 0, %s25
      %s42 = sphi 0, %s26
      %s46 = sphi 0, %s46
      %s48 = sphi 0, %s46
      %s49 = sphi 0, %s48
      %s63 = sphi 0, %s49
      %s67 = sphi 0, %s67
      %s69 = sphi 0, %s67
      %s70 = sphi 0, %s69
      %s84 = sphi 0, %s70
      %s90 = sphi 0, %s92
      %s93 = sphi 0, %s90
      %s94 = sphi 0, %s93
      %s110 = sphi 0, %s94
    $region4: #{tpu_custom_call.1} parent=1 // loop_header_branch
      %15 = sbr.rel (%p13) target = $region8
    $region5: #{tpu_custom_call.1} parent=1 // loop_body
      %s17 = ssub.s32 %s12, 1
      %s18 = ssub.s32 %s12, 2
      %s19 = sadd.s32 %s12, 1
      %s20 = ssub.s32 %s12, %s19
      %p21 = scmp.eq.s32.totalorder %s20, 0
      %s23 = sadd.s32 %s22, 1
      %s24 = scalar_select %p21, %s22, %s23
      %p27 = pneg %p21
      %p28 = scmp.eq.s32.totalorder %s12, 5
      %p29 = por %p27, %p28
      %p30 = scmp.ne.s32.totalorder %s22, %s25
      %p31 = scmp.eq.s32.totalorder %s12, 0
      %p32 = por %p30, %p31
      %p33 = scmp.ne.s32.totalorder %s22, %s25
      %p34 = scmp.eq.s32.totalorder %s17, 5
      %p35 = por %p33, %p34
      %p36 = scmp.ne.s32.totalorder %s25, %s26
      %p37 = scmp.eq.s32.totalorder %s17, 0
      %p38 = por %p36, %p37
      %p39 = scmp.ne.s32.totalorder %s25, %s26
      %p40 = scmp.eq.s32.totalorder %s18, 5
      %p41 = por %p39, %p40
      %p43 = scmp.ne.s32.totalorder %s26, %s42
      %p44 = scmp.eq.s32.totalorder %s18, 0
      %p45 = por %p43, %p44
      %s47 = sadd.s32 %s46, 1
      %p50 = scmp.eq.s32.totalorder %s12, 5
      %p51 = scmp.ne.s32.totalorder %s46, %s48
      %p52 = scmp.eq.s32.totalorder %s12, 0
      %p53 = por %p51, %p52
      %p54 = scmp.ne.s32.totalorder %s46, %s48
      %p55 = scmp.eq.s32.totalorder %s17, 5
      %p56 = por %p54, %p55
      %p57 = scmp.ne.s32.totalorder %s48, %s49
      %p58 = scmp.eq.s32.totalorder %s17, 0
      %p59 = por %p57, %p58
      %p60 = scmp.ne.s32.totalorder %s48, %s49
      %p61 = scmp.eq.s32.totalorder %s18, 5
      %p62 = por %p60, %p61
      %p64 = scmp.ne.s32.totalorder %s49, %s63
      %p65 = scmp.eq.s32.totalorder %s18, 0
      %p66 = por %p64, %p65
      %s68 = sadd.s32 %s67, 1
      %p71 = scmp.eq.s32.totalorder %s12, 5
      %p72 = scmp.ne.s32.totalorder %s67, %s69
      %p73 = scmp.eq.s32.totalorder %s12, 0
      %p74 = por %p72, %p73
      %p75 = scmp.ne.s32.totalorder %s67, %s69
      %p76 = scmp.eq.s32.totalorder %s17, 5
      %p77 = por %p75, %p76
      %p78 = scmp.ne.s32.totalorder %s69, %s70
      %p79 = scmp.eq.s32.totalorder %s17, 0
      %p80 = por %p78, %p79
      %p81 = scmp.ne.s32.totalorder %s69, %s70
      %p82 = scmp.eq.s32.totalorder %s18, 5
      %p83 = por %p81, %p82
      %p85 = scmp.ne.s32.totalorder %s70, %s84
      %p86 = scmp.eq.s32.totalorder %s18, 0
      %p87 = por %p85, %p86
      %s88 = ssub.s32 %s12, %s19
      %p89 = scmp.eq.s32.totalorder %s88, 0
      %s91 = sadd.s32 %s90, 1
      %s92 = scalar_select %p89, %s90, %s91
      %p95 = pneg %p89
      %p96 = scmp.eq.s32.totalorder %s12, 5
      %p97 = por %p95, %p96
      %p98 = scmp.ne.s32.totalorder %s90, %s93
      %p99 = scmp.eq.s32.totalorder %s12, 0
      %p100 = por %p98, %p99
      %p101 = scmp.ne.s32.totalorder %s90, %s93
      %p102 = scmp.eq.s32.totalorder %s17, 5
      %p103 = por %p101, %p102
      %p104 = scmp.ne.s32.totalorder %s93, %s94
      %p105 = scmp.eq.s32.totalorder %s17, 0
      %p106 = por %p104, %p105
      %p107 = scmp.ne.s32.totalorder %s93, %s94
      %p108 = scmp.eq.s32.totalorder %s18, 5
      %p109 = por %p107, %p108
      %p111 = scmp.ne.s32.totalorder %s94, %s110
      %p112 = scmp.eq.s32.totalorder %s18, 0
      %p113 = por %p111, %p112
      %p114 = scmp.le.s32.totalorder 1, %s12
      %p115 = scmp.lt.s32.totalorder %s12, 7
      %p116 = pnand %p114, %p115
      %p117 = pneg %p116
      // Predicated region
      $region9: #{tpu_custom_call.1} parent=5 // pred_check
        _
      $region10: #{tpu_custom_call.1} parent=5 // pred_check_branch
        %119 = sbr.rel (%p116) target = $region12
      $region11: #{tpu_custom_call.1} parent=5 // pred_region
        %s120 = ssub.s32 %s12, 1
        // Predicated region
        $region13: #{tpu_custom_call.1} parent=11 // pred_check
          %p121 = pneg %p59
        $region14: #{tpu_custom_call.1} parent=11 // pred_check_branch
          %123 = sbr.rel (%p121) target = $region16
        $region15: #{tpu_custom_call.1} parent=11 // pred_region
          _
        $region16: #{tpu_custom_call.1} parent=11 // pred_fallthru
          _
        // Predicated region
        $region17: #{tpu_custom_call.1} parent=11 // pred_check
          %p124 = pneg %p80
        $region18: #{tpu_custom_call.1} parent=11 // pred_check_branch
          %126 = sbr.rel (%p124) target = $region20
        $region19: #{tpu_custom_call.1} parent=11 // pred_region
          _
        $region20: #{tpu_custom_call.1} parent=11 // pred_fallthru
          _
      $region12: #{tpu_custom_call.1} parent=5 // pred_fallthru
        _
      %p127 = scmp.lt.s32.totalorder %s12, 6
      // Predicated region
      $region21: #{tpu_custom_call.1} parent=5 // pred_check
        %p128 = pneg %p127
      $region22: #{tpu_custom_call.1} parent=5 // pred_check_branch
        %130 = sbr.rel (%p128) target = $region24
      $region23: #{tpu_custom_call.1} parent=5 // pred_region
        // Predicated region
        $region25: #{tpu_custom_call.1} parent=23 // pred_check
          %p131 = pneg %p32
        $region26: #{tpu_custom_call.1} parent=23 // pred_check_branch
          %133 = sbr.rel (%p131) target = $region28
        $region27: #{tpu_custom_call.1} parent=23 // pred_region
          %p134 = scmp.lt.s32.totalorder %s12, 5
          %s135 = scalar_select %p134, %s12, 5
          %s136 = smul.addr %s135, 20
          %s137 = smul.addr %s136, 8
          %s138 = scalar_lea.vmem %s0, %s137
        $region28: #{tpu_custom_call.1} parent=23 // pred_fallthru
          _
      $region24: #{tpu_custom_call.1} parent=5 // pred_fallthru
        _
      %p139 = scmp.le.s32.totalorder 1, %s12
      %p140 = scmp.lt.s32.totalorder %s12, 7
      %p141 = pnand %p139, %p140
      %p142 = pneg %p141
      // Predicated region
      $region29: #{tpu_custom_call.1} parent=5 // pred_check
        _
      $region30: #{tpu_custom_call.1} parent=5 // pred_check_branch
        %144 = sbr.rel (%p141) target = $region32
      $region31: #{tpu_custom_call.1} parent=5 // pred_region
        %s145 = ssub.s32 %s12, 1
        %p146 = scmp.lt.s32.totalorder %s17, 5
        %s147 = scalar_select %p146, %s17, 5
        %s148 = smul.addr %s147, 20
        %s149 = smul.addr %s148, 8
        %s150 = scalar_lea.vmem %s0, %s149
        %p151 = pneg %p38
        %p152 = pneg %p35
        %p153 = pneg %p59
        %p154 = pneg %p56
        %p155 = pneg %p80
        %p156 = pneg %p77
        %p157 = pneg %p106
        %p158 = pneg %p103
        %s159 = sand.u32 %s93, 1
        %s160 = scalar_lea.sflag [#allocation3], %s159
        %s161 = sand.u32 %s93, 1
        %s162 = scalar_lea.vmem [#allocation2], %s161
        %p163 = scmp.lt.s32.totalorder %s17, 5
        %s164 = scalar_select %p163, %s17, 5
        %s165 = smul.addr %s164, 20
        %s166 = smul.addr %s165, 8
        %s167 = scalar_lea.vmem %s0, %s166
        %v168 = vld [vmem:[%s167] sm:$0xff]
        %v169 = vld [vmem:[%s167 + $0x10] sm:$0xff]
        %v170 = vld [vmem:[%s167 + $0x20] sm:$0xff]
        %v171 = vld [vmem:[%s167 + $0x30] sm:$0xff]
        %v172 = vld [vmem:[%s167 + $0x40] sm:$0xff]
        %v173 = vld [vmem:[%s167 + $0x50] sm:$0xff]
        %v174 = vld [vmem:[%s167 + $0x60] sm:$0xff]
        %v175 = vld [vmem:[%s167 + $0x70] sm:$0xff]
        %v176 = vld [vmem:[%s1] sm:$0x7]
        %v177 = vld [vmem:[%s167 + $0x1] sm:$0xff]
        %v178 = vld [vmem:[%s167 + $0x11] sm:$0xff]
        %v179 = vld [vmem:[%s167 + $0x21] sm:$0xff]
        %v180 = vld [vmem:[%s167 + $0x31] sm:$0xff]
        %v181 = vld [vmem:[%s167 + $0x41] sm:$0xff]
        %v182 = vld [vmem:[%s167 + $0x51] sm:$0xff]
        %v183 = vld [vmem:[%s167 + $0x61] sm:$0xff]
        %v184 = vld [vmem:[%s167 + $0x71] sm:$0xff]
        %s185 = scalar_lea.vmem %s1, 4
        %v186 = vld [vmem:[%s185] sm:$0x7]
        %vm187 = vcmask 23552
        %v189 = vsel %vm187, %v177, 0
        %v192 = vsel %vm187, %v178, 0
        %v195 = vsel %vm187, %v179, 0
        %v198 = vsel %vm187, %v180, 0
        %v201 = vsel %vm187, %v181, 0
        %v204 = vsel %vm187, %v182, 0
        %v207 = vsel %vm187, %v183, 0
        %v210 = vsel %vm187, %v184, 0
        %vm212 = vcmask 1042432
        %v214 = vsel %vm212, %v186, 0
        %216 = vmatpush.msra.mxu0 0.0
        %217 = vmatpush.msra.mxu0 0.0
        %218 = vmatpush.msra.mxu0 0.0
        %219 = vmatpush.msra.mxu0 0.0
        %220 = vmatpush.msra.mxu0 0.0
        %221 = vmatpush.msra.mxu0 0.0
        %222 = vmatpush.msra.mxu0 0.0
        %223 = vmatpush.msra.mxu0 0.0
        %224 = vmatpush.msra.mxu0 0.0
        %225 = vmatpush.msra.mxu0 0.0
        %226 = vmatpush.msra.mxu0 0.0
        %227 = vmatpush.msra.mxu0 0.0
        %228 = vmatpush.msra.mxu0 0.0
        %229 = vmatpush.msra.mxu0 0.0
        %230 = vmatpush.msra.mxu0 0.0
        %231 = vmatpush.msra.mxu0 %v214
        %232 = vmatmul.f32.gmra.mxu0 %v189
        %v233 = vpop.f32.mrf.mxu0
        %v234 = vadd.f32 0.0, %v233
        %235 = vmatmul.f32.gmra.mxu0 %v192
        %v236 = vpop.f32.mrf.mxu0
        %v237 = vadd.f32 0.0, %v236
        %238 = vmatmul.f32.gmra.mxu0 %v195
        %v239 = vpop.f32.mrf.mxu0
        %v240 = vadd.f32 0.0, %v239
        %241 = vmatmul.f32.gmra.mxu0 %v198
        %v242 = vpop.f32.mrf.mxu0
        %v243 = vadd.f32 0.0, %v242
        %244 = vmatmul.f32.gmra.mxu0 %v201
        %v245 = vpop.f32.mrf.mxu0
        %v246 = vadd.f32 0.0, %v245
        %247 = vmatmul.f32.gmra.mxu0 %v204
        %v248 = vpop.f32.mrf.mxu0
        %v249 = vadd.f32 0.0, %v248
        %250 = vmatmul.f32.gmra.mxu0 %v207
        %v251 = vpop.f32.mrf.mxu0
        %v252 = vadd.f32 0.0, %v251
        %253 = vmatmul.f32.gmra.mxu0 %v210
        %v254 = vpop.f32.mrf.mxu0
        %v255 = vadd.f32 0.0, %v254
        %256 = vdwg.mxu0
        %v258 = vsel %vm187, %v168, 0
        %v261 = vsel %vm187, %v169, 0
        %v264 = vsel %vm187, %v170, 0
        %v267 = vsel %vm187, %v171, 0
        %v270 = vsel %vm187, %v172, 0
        %v273 = vsel %vm187, %v173, 0
        %v276 = vsel %vm187, %v174, 0
        %v279 = vsel %vm187, %v175, 0
        %v282 = vsel %vm212, %v176, 0
        %284 = vmatpush.msra.mxu0 0.0
        %285 = vmatpush.msra.mxu0 0.0
        %286 = vmatpush.msra.mxu0 0.0
        %287 = vmatpush.msra.mxu0 0.0
        %288 = vmatpush.msra.mxu0 0.0
        %289 = vmatpush.msra.mxu0 0.0
        %290 = vmatpush.msra.mxu0 0.0
        %291 = vmatpush.msra.mxu0 0.0
        %292 = vmatpush.msra.mxu0 0.0
        %293 = vmatpush.msra.mxu0 0.0
        %294 = vmatpush.msra.mxu0 0.0
        %295 = vmatpush.msra.mxu0 0.0
        %296 = vmatpush.msra.mxu0 0.0
        %297 = vmatpush.msra.mxu0 0.0
        %298 = vmatpush.msra.mxu0 0.0
        %299 = vmatpush.msra.mxu0 %v282
        %300 = vmatmul.f32.gmra.mxu0 %v258
        %v301 = vpop.f32.mrf.mxu0
        %v302 = vadd.f32 %v234, %v301
        %303 = vmatmul.f32.gmra.mxu0 %v261
        %v304 = vpop.f32.mrf.mxu0
        %v305 = vadd.f32 %v237, %v304
        %306 = vmatmul.f32.gmra.mxu0 %v264
        %v307 = vpop.f32.mrf.mxu0
        %v308 = vadd.f32 %v240, %v307
        %309 = vmatmul.f32.gmra.mxu0 %v267
        %v310 = vpop.f32.mrf.mxu0
        %v311 = vadd.f32 %v243, %v310
        %312 = vmatmul.f32.gmra.mxu0 %v270
        %v313 = vpop.f32.mrf.mxu0
        %v314 = vadd.f32 %v246, %v313
        %315 = vmatmul.f32.gmra.mxu0 %v273
        %v316 = vpop.f32.mrf.mxu0
        %v317 = vadd.f32 %v249, %v316
        %318 = vmatmul.f32.gmra.mxu0 %v276
        %v319 = vpop.f32.mrf.mxu0
        %v320 = vadd.f32 %v252, %v319
        %321 = vmatmul.f32.gmra.mxu0 %v279
        %v322 = vpop.f32.mrf.mxu0
        %v323 = vadd.f32 %v255, %v322
        %324 = vdwg.mxu0
        %v325 = vld [vmem:[%s167 + $0x2] sm:$0xff]
        %v326 = vld [vmem:[%s167 + $0x12] sm:$0xff]
        %v327 = vld [vmem:[%s167 + $0x22] sm:$0xff]
        %v328 = vld [vmem:[%s167 + $0x32] sm:$0xff]
        %v329 = vld [vmem:[%s167 + $0x42] sm:$0xff]
        %v330 = vld [vmem:[%s167 + $0x52] sm:$0xff]
        %v331 = vld [vmem:[%s167 + $0x62] sm:$0xff]
        %v332 = vld [vmem:[%s167 + $0x72] sm:$0xff]
        %s333 = scalar_lea.vmem %s1, 8
        %v334 = vld [vmem:[%s333] sm:$0x7]
        %v336 = vsel %vm187, %v325, 0
        %v339 = vsel %vm187, %v326, 0
        %v342 = vsel %vm187, %v327, 0
        %v345 = vsel %vm187, %v328, 0
        %v348 = vsel %vm187, %v329, 0
        %v351 = vsel %vm187, %v330, 0
        %v354 = vsel %vm187, %v331, 0
        %v357 = vsel %vm187, %v332, 0
        %v360 = vsel %vm212, %v334, 0
        %362 = vmatpush.msra.mxu0 0.0
        %363 = vmatpush.msra.mxu0 0.0
        %364 = vmatpush.msra.mxu0 0.0
        %365 = vmatpush.msra.mxu0 0.0
        %366 = vmatpush.msra.mxu0 0.0
        %367 = vmatpush.msra.mxu0 0.0
        %368 = vmatpush.msra.mxu0 0.0
        %369 = vmatpush.msra.mxu0 0.0
        %370 = vmatpush.msra.mxu0 0.0
        %371 = vmatpush.msra.mxu0 0.0
        %372 = vmatpush.msra.mxu0 0.0
        %373 = vmatpush.msra.mxu0 0.0
        %374 = vmatpush.msra.mxu0 0.0
        %375 = vmatpush.msra.mxu0 0.0
        %376 = vmatpush.msra.mxu0 0.0
        %377 = vmatpush.msra.mxu0 %v360
        %378 = vmatmul.f32.gmra.mxu0 %v336
        %v379 = vpop.f32.mrf.mxu0
        %v380 = vadd.f32 0.0, %v379
        %381 = vmatmul.f32.gmra.mxu0 %v339
        %v382 = vpop.f32.mrf.mxu0
        %v383 = vadd.f32 0.0, %v382
        %384 = vmatmul.f32.gmra.mxu0 %v342
        %v385 = vpop.f32.mrf.mxu0
        %v386 = vadd.f32 0.0, %v385
        %387 = vmatmul.f32.gmra.mxu0 %v345
        %v388 = vpop.f32.mrf.mxu0
        %v389 = vadd.f32 0.0, %v388
        %390 = vmatmul.f32.gmra.mxu0 %v348
        %v391 = vpop.f32.mrf.mxu0
        %v392 = vadd.f32 0.0, %v391
        %393 = vmatmul.f32.gmra.mxu0 %v351
        %v394 = vpop.f32.mrf.mxu0
        %v395 = vadd.f32 0.0, %v394
        %396 = vmatmul.f32.gmra.mxu0 %v354
        %v397 = vpop.f32.mrf.mxu0
        %v398 = vadd.f32 0.0, %v397
        %399 = vmatmul.f32.gmra.mxu0 %v357
        %v400 = vpop.f32.mrf.mxu0
        %v401 = vadd.f32 0.0, %v400
        %402 = vdwg.mxu0
        %v403 = vadd.f32 %v302, %v380
        %v404 = vadd.f32 %v305, %v383
        %v405 = vadd.f32 %v308, %v386
        %v406 = vadd.f32 %v311, %v389
        %v407 = vadd.f32 %v314, %v392
        %v408 = vadd.f32 %v317, %v395
        %v409 = vadd.f32 %v320, %v398
        %v410 = vadd.f32 %v323, %v401
        %s411 = scalar_lea.vmem %s167, 16
        %v412 = vld [vmem:[%s411] sm:$0xff]
        %v413 = vld [vmem:[%s411 + $0x10] sm:$0xff]
        %v414 = vld [vmem:[%s411 + $0x20] sm:$0xff]
        %v415 = vld [vmem:[%s411 + $0x30] sm:$0xff]
        %v416 = vld [vmem:[%s411 + $0x40] sm:$0xff]
        %v417 = vld [vmem:[%s411 + $0x50] sm:$0xff]
        %v418 = vld [vmem:[%s411 + $0x60] sm:$0xff]
        %v419 = vld [vmem:[%s411 + $0x70] sm:$0xff]
        %s420 = scalar_lea.vmem %s1, 12
        %v421 = vld [vmem:[%s420] sm:$0x7]
        %v423 = vsel %vm187, %v412, 0
        %v426 = vsel %vm187, %v413, 0
        %v429 = vsel %vm187, %v414, 0
        %v432 = vsel %vm187, %v415, 0
        %v435 = vsel %vm187, %v416, 0
        %v438 = vsel %vm187, %v417, 0
        %v441 = vsel %vm187, %v418, 0
        %v444 = vsel %vm187, %v419, 0
        %v447 = vsel %vm212, %v421, 0
        %449 = vmatpush.msra.mxu0 0.0
        %450 = vmatpush.msra.mxu0 0.0
        %451 = vmatpush.msra.mxu0 0.0
        %452 = vmatpush.msra.mxu0 0.0
        %453 = vmatpush.msra.mxu0 0.0
        %454 = vmatpush.msra.mxu0 0.0
        %455 = vmatpush.msra.mxu0 0.0
        %456 = vmatpush.msra.mxu0 0.0
        %457 = vmatpush.msra.mxu0 0.0
        %458 = vmatpush.msra.mxu0 0.0
        %459 = vmatpush.msra.mxu0 0.0
        %460 = vmatpush.msra.mxu0 0.0
        %461 = vmatpush.msra.mxu0 0.0
        %462 = vmatpush.msra.mxu0 0.0
        %463 = vmatpush.msra.mxu0 0.0
        %464 = vmatpush.msra.mxu0 %v447
        %465 = vmatmul.f32.gmra.mxu0 %v423
        %v466 = vpop.f32.mrf.mxu0
        %v467 = vadd.f32 0.0, %v466
        %468 = vmatmul.f32.gmra.mxu0 %v426
        %v469 = vpop.f32.mrf.mxu0
        %v470 = vadd.f32 0.0, %v469
        %471 = vmatmul.f32.gmra.mxu0 %v429
        %v472 = vpop.f32.mrf.mxu0
        %v473 = vadd.f32 0.0, %v472
        %474 = vmatmul.f32.gmra.mxu0 %v432
        %v475 = vpop.f32.mrf.mxu0
        %v476 = vadd.f32 0.0, %v475
        %477 = vmatmul.f32.gmra.mxu0 %v435
        %v478 = vpop.f32.mrf.mxu0
        %v479 = vadd.f32 0.0, %v478
        %480 = vmatmul.f32.gmra.mxu0 %v438
        %v481 = vpop.f32.mrf.mxu0
        %v482 = vadd.f32 0.0, %v481
        %483 = vmatmul.f32.gmra.mxu0 %v441
        %v484 = vpop.f32.mrf.mxu0
        %v485 = vadd.f32 0.0, %v484
        %486 = vmatmul.f32.gmra.mxu0 %v444
        %v487 = vpop.f32.mrf.mxu0
        %v488 = vadd.f32 0.0, %v487
        %489 = vdwg.mxu0
        %v490 = vadd.f32 %v403, %v467
        %v491 = vadd.f32 %v404, %v470
        %v492 = vadd.f32 %v405, %v473
        %v493 = vadd.f32 %v406, %v476
        %v494 = vadd.f32 %v407, %v479
        %v495 = vadd.f32 %v408, %v482
        %v496 = vadd.f32 %v409, %v485
        %v497 = vadd.f32 %v410, %v488
        %v498 = vld [vmem:[%s411 + $0x1] sm:$0xff]
        %v499 = vld [vmem:[%s411 + $0x11] sm:$0xff]
        %v500 = vld [vmem:[%s411 + $0x21] sm:$0xff]
        %v501 = vld [vmem:[%s411 + $0x31] sm:$0xff]
        %v502 = vld [vmem:[%s411 + $0x41] sm:$0xff]
        %v503 = vld [vmem:[%s411 + $0x51] sm:$0xff]
        %v504 = vld [vmem:[%s411 + $0x61] sm:$0xff]
        %v505 = vld [vmem:[%s411 + $0x71] sm:$0xff]
        %s506 = scalar_lea.vmem %s1, 16
        %v507 = vld [vmem:[%s506] sm:$0x7]
        %v509 = vsel %vm187, %v498, 0
        %v512 = vsel %vm187, %v499, 0
        %v515 = vsel %vm187, %v500, 0
        %v518 = vsel %vm187, %v501, 0
        %v521 = vsel %vm187, %v502, 0
        %v524 = vsel %vm187, %v503, 0
        %v527 = vsel %vm187, %v504, 0
        %v530 = vsel %vm187, %v505, 0
        %v533 = vsel %vm212, %v507, 0
        %535 = vmatpush.msra.mxu0 0.0
        %536 = vmatpush.msra.mxu0 0.0
        %537 = vmatpush.msra.mxu0 0.0
        %538 = vmatpush.msra.mxu0 0.0
        %539 = vmatpush.msra.mxu0 0.0
        %540 = vmatpush.msra.mxu0 0.0
        %541 = vmatpush.msra.mxu0 0.0
        %542 = vmatpush.msra.mxu0 0.0
        %543 = vmatpush.msra.mxu0 0.0
        %544 = vmatpush.msra.mxu0 0.0
        %545 = vmatpush.msra.mxu0 0.0
        %546 = vmatpush.msra.mxu0 0.0
        %547 = vmatpush.msra.mxu0 0.0
        %548 = vmatpush.msra.mxu0 0.0
        %549 = vmatpush.msra.mxu0 0.0
        %550 = vmatpush.msra.mxu0 %v533
        %551 = vmatmul.f32.gmra.mxu0 %v509
        %v552 = vpop.f32.mrf.mxu0
        %v553 = vadd.f32 0.0, %v552
        %554 = vmatmul.f32.gmra.mxu0 %v512
        %v555 = vpop.f32.mrf.mxu0
        %v556 = vadd.f32 0.0, %v555
        %557 = vmatmul.f32.gmra.mxu0 %v515
        %v558 = vpop.f32.mrf.mxu0
        %v559 = vadd.f32 0.0, %v558
        %560 = vmatmul.f32.gmra.mxu0 %v518
        %v561 = vpop.f32.mrf.mxu0
        %v562 = vadd.f32 0.0, %v561
        %563 = vmatmul.f32.gmra.mxu0 %v521
        %v564 = vpop.f32.mrf.mxu0
        %v565 = vadd.f32 0.0, %v564
        %566 = vmatmul.f32.gmra.mxu0 %v524
        %v567 = vpop.f32.mrf.mxu0
        %v568 = vadd.f32 0.0, %v567
        %569 = vmatmul.f32.gmra.mxu0 %v527
        %v570 = vpop.f32.mrf.mxu0
        %v571 = vadd.f32 0.0, %v570
        %572 = vmatmul.f32.gmra.mxu0 %v530
        %v573 = vpop.f32.mrf.mxu0
        %v574 = vadd.f32 0.0, %v573
        %575 = vdwg.mxu0
        %v576 = vadd.f32 %v490, %v553
        %v577 = vadd.f32 %v491, %v556
        %v578 = vadd.f32 %v492, %v559
        %v579 = vadd.f32 %v493, %v562
        %v580 = vadd.f32 %v494, %v565
        %v581 = vadd.f32 %v495, %v568
        %v582 = vadd.f32 %v496, %v571
        %v583 = vadd.f32 %v497, %v574
        %v584 = vld [vmem:[%s411 + $0x2] sm:$0xff]
        %v585 = vld [vmem:[%s411 + $0x12] sm:$0xff]
        %v586 = vld [vmem:[%s411 + $0x22] sm:$0xff]
        %v587 = vld [vmem:[%s411 + $0x32] sm:$0xff]
        %v588 = vld [vmem:[%s411 + $0x42] sm:$0xff]
        %v589 = vld [vmem:[%s411 + $0x52] sm:$0xff]
        %v590 = vld [vmem:[%s411 + $0x62] sm:$0xff]
        %v591 = vld [vmem:[%s411 + $0x72] sm:$0xff]
        %s592 = scalar_lea.vmem %s1, 20
        %v593 = vld [vmem:[%s592] sm:$0x7]
        %v595 = vsel %vm187, %v584, 0
        %v598 = vsel %vm187, %v585, 0
        %v601 = vsel %vm187, %v586, 0
        %v604 = vsel %vm187, %v587, 0
        %v607 = vsel %vm187, %v588, 0
        %v610 = vsel %vm187, %v589, 0
        %v613 = vsel %vm187, %v590, 0
        %v616 = vsel %vm187, %v591, 0
        %v619 = vsel %vm212, %v593, 0
        %621 = vmatpush.msra.mxu0 0.0
        %622 = vmatpush.msra.mxu0 0.0
        %623 = vmatpush.msra.mxu0 0.0
        %624 = vmatpush.msra.mxu0 0.0
        %625 = vmatpush.msra.mxu0 0.0
        %626 = vmatpush.msra.mxu0 0.0
        %627 = vmatpush.msra.mxu0 0.0
        %628 = vmatpush.msra.mxu0 0.0
        %629 = vmatpush.msra.mxu0 0.0
        %630 = vmatpush.msra.mxu0 0.0
        %631 = vmatpush.msra.mxu0 0.0
        %632 = vmatpush.msra.mxu0 0.0
        %633 = vmatpush.msra.mxu0 0.0
        %634 = vmatpush.msra.mxu0 0.0
        %635 = vmatpush.msra.mxu0 0.0
        %636 = vmatpush.msra.mxu0 %v619
        %637 = vmatmul.f32.gmra.mxu0 %v595
        %v638 = vpop.f32.mrf.mxu0
        %v639 = vadd.f32 0.0, %v638
        %640 = vmatmul.f32.gmra.mxu0 %v598
        %v641 = vpop.f32.mrf.mxu0
        %v642 = vadd.f32 0.0, %v641
        %643 = vmatmul.f32.gmra.mxu0 %v601
        %v644 = vpop.f32.mrf.mxu0
        %v645 = vadd.f32 0.0, %v644
        %646 = vmatmul.f32.gmra.mxu0 %v604
        %v647 = vpop.f32.mrf.mxu0
        %v648 = vadd.f32 0.0, %v647
        %649 = vmatmul.f32.gmra.mxu0 %v607
        %v650 = vpop.f32.mrf.mxu0
        %v651 = vadd.f32 0.0, %v650
        %652 = vmatmul.f32.gmra.mxu0 %v610
        %v653 = vpop.f32.mrf.mxu0
        %v654 = vadd.f32 0.0, %v653
        %655 = vmatmul.f32.gmra.mxu0 %v613
        %v656 = vpop.f32.mrf.mxu0
        %v657 = vadd.f32 0.0, %v656
        %658 = vmatmul.f32.gmra.mxu0 %v616
        %v659 = vpop.f32.mrf.mxu0
        %v660 = vadd.f32 0.0, %v659
        %661 = vdwg.mxu0
        %v662 = vadd.f32 %v576, %v639
        %v663 = vadd.f32 %v577, %v642
        %v664 = vadd.f32 %v578, %v645
        %v665 = vadd.f32 %v579, %v648
        %v666 = vadd.f32 %v580, %v651
        %v667 = vadd.f32 %v581, %v654
        %v668 = vadd.f32 %v582, %v657
        %v669 = vadd.f32 %v583, %v660
        %s670 = scalar_lea.vmem %s167, 32
        %v671 = vld [vmem:[%s670] sm:$0xff]
        %v672 = vld [vmem:[%s670 + $0x10] sm:$0xff]
        %v673 = vld [vmem:[%s670 + $0x20] sm:$0xff]
        %v674 = vld [vmem:[%s670 + $0x30] sm:$0xff]
        %v675 = vld [vmem:[%s670 + $0x40] sm:$0xff]
        %v676 = vld [vmem:[%s670 + $0x50] sm:$0xff]
        %v677 = vld [vmem:[%s670 + $0x60] sm:$0xff]
        %v678 = vld [vmem:[%s670 + $0x70] sm:$0xff]
        %s679 = scalar_lea.vmem %s1, 24
        %v680 = vld [vmem:[%s679] sm:$0x7]
        %v682 = vsel %vm187, %v671, 0
        %v685 = vsel %vm187, %v672, 0
        %v688 = vsel %vm187, %v673, 0
        %v691 = vsel %vm187, %v674, 0
        %v694 = vsel %vm187, %v675, 0
        %v697 = vsel %vm187, %v676, 0
        %v700 = vsel %vm187, %v677, 0
        %v703 = vsel %vm187, %v678, 0
        %v706 = vsel %vm212, %v680, 0
        %708 = vmatpush.msra.mxu0 0.0
        %709 = vmatpush.msra.mxu0 0.0
        %710 = vmatpush.msra.mxu0 0.0
        %711 = vmatpush.msra.mxu0 0.0
        %712 = vmatpush.msra.mxu0 0.0
        %713 = vmatpush.msra.mxu0 0.0
        %714 = vmatpush.msra.mxu0 0.0
        %715 = vmatpush.msra.mxu0 0.0
        %716 = vmatpush.msra.mxu0 0.0
        %717 = vmatpush.msra.mxu0 0.0
        %718 = vmatpush.msra.mxu0 0.0
        %719 = vmatpush.msra.mxu0 0.0
        %720 = vmatpush.msra.mxu0 0.0
        %721 = vmatpush.msra.mxu0 0.0
        %722 = vmatpush.msra.mxu0 0.0
        %723 = vmatpush.msra.mxu0 %v706
        %724 = vmatmul.f32.gmra.mxu0 %v682
        %v725 = vpop.f32.mrf.mxu0
        %v726 = vadd.f32 0.0, %v725
        %727 = vmatmul.f32.gmra.mxu0 %v685
        %v728 = vpop.f32.mrf.mxu0
        %v729 = vadd.f32 0.0, %v728
        %730 = vmatmul.f32.gmra.mxu0 %v688
        %v731 = vpop.f32.mrf.mxu0
        %v732 = vadd.f32 0.0, %v731
        %733 = vmatmul.f32.gmra.mxu0 %v691
        %v734 = vpop.f32.mrf.mxu0
        %v735 = vadd.f32 0.0, %v734
        %736 = vmatmul.f32.gmra.mxu0 %v694
        %v737 = vpop.f32.mrf.mxu0
        %v738 = vadd.f32 0.0, %v737
        %739 = vmatmul.f32.gmra.mxu0 %v697
        %v740 = vpop.f32.mrf.mxu0
        %v741 = vadd.f32 0.0, %v740
        %742 = vmatmul.f32.gmra.mxu0 %v700
        %v743 = vpop.f32.mrf.mxu0
        %v744 = vadd.f32 0.0, %v743
        %745 = vmatmul.f32.gmra.mxu0 %v703
        %v746 = vpop.f32.mrf.mxu0
        %v747 = vadd.f32 0.0, %v746
        %748 = vdwg.mxu0
        %v749 = vadd.f32 %v662, %v726
        %v750 = vadd.f32 %v663, %v729
        %v751 = vadd.f32 %v664, %v732
        %v752 = vadd.f32 %v665, %v735
        %v753 = vadd.f32 %v666, %v738
        %v754 = vadd.f32 %v667, %v741
        %v755 = vadd.f32 %v668, %v744
        %v756 = vadd.f32 %v669, %v747
        %v757 = vld [vmem:[%s670 + $0x1] sm:$0xff]
        %v758 = vld [vmem:[%s670 + $0x11] sm:$0xff]
        %v759 = vld [vmem:[%s670 + $0x21] sm:$0xff]
        %v760 = vld [vmem:[%s670 + $0x31] sm:$0xff]
        %v761 = vld [vmem:[%s670 + $0x41] sm:$0xff]
        %v762 = vld [vmem:[%s670 + $0x51] sm:$0xff]
        %v763 = vld [vmem:[%s670 + $0x61] sm:$0xff]
        %v764 = vld [vmem:[%s670 + $0x71] sm:$0xff]
        %s765 = scalar_lea.vmem %s1, 28
        %v766 = vld [vmem:[%s765] sm:$0x7]
        %v768 = vsel %vm187, %v757, 0
        %v771 = vsel %vm187, %v758, 0
        %v774 = vsel %vm187, %v759, 0
        %v777 = vsel %vm187, %v760, 0
        %v780 = vsel %vm187, %v761, 0
        %v783 = vsel %vm187, %v762, 0
        %v786 = vsel %vm187, %v763, 0
        %v789 = vsel %vm187, %v764, 0
        %v792 = vsel %vm212, %v766, 0
        %794 = vmatpush.msra.mxu0 0.0
        %795 = vmatpush.msra.mxu0 0.0
        %796 = vmatpush.msra.mxu0 0.0
        %797 = vmatpush.msra.mxu0 0.0
        %798 = vmatpush.msra.mxu0 0.0
        %799 = vmatpush.msra.mxu0 0.0
        %800 = vmatpush.msra.mxu0 0.0
        %801 = vmatpush.msra.mxu0 0.0
        %802 = vmatpush.msra.mxu0 0.0
        %803 = vmatpush.msra.mxu0 0.0
        %804 = vmatpush.msra.mxu0 0.0
        %805 = vmatpush.msra.mxu0 0.0
        %806 = vmatpush.msra.mxu0 0.0
        %807 = vmatpush.msra.mxu0 0.0
        %808 = vmatpush.msra.mxu0 0.0
        %809 = vmatpush.msra.mxu0 %v792
        %810 = vmatmul.f32.gmra.mxu0 %v768
        %v811 = vpop.f32.mrf.mxu0
        %v812 = vadd.f32 0.0, %v811
        %813 = vmatmul.f32.gmra.mxu0 %v771
        %v814 = vpop.f32.mrf.mxu0
        %v815 = vadd.f32 0.0, %v814
        %816 = vmatmul.f32.gmra.mxu0 %v774
        %v817 = vpop.f32.mrf.mxu0
        %v818 = vadd.f32 0.0, %v817
        %819 = vmatmul.f32.gmra.mxu0 %v777
        %v820 = vpop.f32.mrf.mxu0
        %v821 = vadd.f32 0.0, %v820
        %822 = vmatmul.f32.gmra.mxu0 %v780
        %v823 = vpop.f32.mrf.mxu0
        %v824 = vadd.f32 0.0, %v823
        %825 = vmatmul.f32.gmra.mxu0 %v783
        %v826 = vpop.f32.mrf.mxu0
        %v827 = vadd.f32 0.0, %v826
        %828 = vmatmul.f32.gmra.mxu0 %v786
        %v829 = vpop.f32.mrf.mxu0
        %v830 = vadd.f32 0.0, %v829
        %831 = vmatmul.f32.gmra.mxu0 %v789
        %v832 = vpop.f32.mrf.mxu0
        %v833 = vadd.f32 0.0, %v832
        %834 = vdwg.mxu0
        %v835 = vadd.f32 %v749, %v812
        %v836 = vadd.f32 %v750, %v815
        %v837 = vadd.f32 %v751, %v818
        %v838 = vadd.f32 %v752, %v821
        %v839 = vadd.f32 %v753, %v824
        %v840 = vadd.f32 %v754, %v827
        %v841 = vadd.f32 %v755, %v830
        %v842 = vadd.f32 %v756, %v833
        %v843 = vld [vmem:[%s670 + $0x2] sm:$0xff]
        %v844 = vld [vmem:[%s670 + $0x12] sm:$0xff]
        %v845 = vld [vmem:[%s670 + $0x22] sm:$0xff]
        %v846 = vld [vmem:[%s670 + $0x32] sm:$0xff]
        %v847 = vld [vmem:[%s670 + $0x42] sm:$0xff]
        %v848 = vld [vmem:[%s670 + $0x52] sm:$0xff]
        %v849 = vld [vmem:[%s670 + $0x62] sm:$0xff]
        %v850 = vld [vmem:[%s670 + $0x72] sm:$0xff]
        %s851 = scalar_lea.vmem %s1, 32
        %v852 = vld [vmem:[%s851] sm:$0x7]
        %v854 = vsel %vm187, %v843, 0
        %v857 = vsel %vm187, %v844, 0
        %v860 = vsel %vm187, %v845, 0
        %v863 = vsel %vm187, %v846, 0
        %v866 = vsel %vm187, %v847, 0
        %v869 = vsel %vm187, %v848, 0
        %v872 = vsel %vm187, %v849, 0
        %v875 = vsel %vm187, %v850, 0
        %v878 = vsel %vm212, %v852, 0
        %880 = vmatpush.msra.mxu0 0.0
        %881 = vmatpush.msra.mxu0 0.0
        %882 = vmatpush.msra.mxu0 0.0
        %883 = vmatpush.msra.mxu0 0.0
        %884 = vmatpush.msra.mxu0 0.0
        %885 = vmatpush.msra.mxu0 0.0
        %886 = vmatpush.msra.mxu0 0.0
        %887 = vmatpush.msra.mxu0 0.0
        %888 = vmatpush.msra.mxu0 0.0
        %889 = vmatpush.msra.mxu0 0.0
        %890 = vmatpush.msra.mxu0 0.0
        %891 = vmatpush.msra.mxu0 0.0
        %892 = vmatpush.msra.mxu0 0.0
        %893 = vmatpush.msra.mxu0 0.0
        %894 = vmatpush.msra.mxu0 0.0
        %895 = vmatpush.msra.mxu0 %v878
        %896 = vmatmul.f32.gmra.mxu0 %v854
        %v897 = vpop.f32.mrf.mxu0
        %v898 = vadd.f32 0.0, %v897
        %899 = vmatmul.f32.gmra.mxu0 %v857
        %v900 = vpop.f32.mrf.mxu0
        %v901 = vadd.f32 0.0, %v900
        %902 = vmatmul.f32.gmra.mxu0 %v860
        %v903 = vpop.f32.mrf.mxu0
        %v904 = vadd.f32 0.0, %v903
        %905 = vmatmul.f32.gmra.mxu0 %v863
        %v906 = vpop.f32.mrf.mxu0
        %v907 = vadd.f32 0.0, %v906
        %908 = vmatmul.f32.gmra.mxu0 %v866
        %v909 = vpop.f32.mrf.mxu0
        %v910 = vadd.f32 0.0, %v909
        %911 = vmatmul.f32.gmra.mxu0 %v869
        %v912 = vpop.f32.mrf.mxu0
        %v913 = vadd.f32 0.0, %v912
        %914 = vmatmul.f32.gmra.mxu0 %v872
        %v915 = vpop.f32.mrf.mxu0
        %v916 = vadd.f32 0.0, %v915
        %917 = vmatmul.f32.gmra.mxu0 %v875
        %v918 = vpop.f32.mrf.mxu0
        %v919 = vadd.f32 0.0, %v918
        %920 = vdwg.mxu0
        %v921 = vadd.f32 %v835, %v898
        %v922 = vadd.f32 %v836, %v901
        %v923 = vadd.f32 %v837, %v904
        %v924 = vadd.f32 %v838, %v907
        %v925 = vadd.f32 %v839, %v910
        %v926 = vadd.f32 %v840, %v913
        %v927 = vadd.f32 %v841, %v916
        %v928 = vadd.f32 %v842, %v919
        %v929 = vld [vmem:[%s2] sm:$0x1]
        %v931 = vperm.slane %v929, 0
        %v933 = vadd.f32 %v921, %v931
        %v934 = vadd.f32 %v922, %v931
        %v935 = vadd.f32 %v923, %v931
        %v936 = vadd.f32 %v924, %v931
        %v937 = vadd.f32 %v925, %v931
        %v938 = vadd.f32 %v926, %v931
        %v939 = vadd.f32 %v927, %v931
        %v940 = vadd.f32 %v928, %v931
        %v941 = vmax.f32 %v933, 0.0
        %v942 = vmax.f32 %v934, 0.0
        %v943 = vmax.f32 %v935, 0.0
        %v944 = vmax.f32 %v936, 0.0
        %v945 = vmax.f32 %v937, 0.0
        %v946 = vmax.f32 %v938, 0.0
        %v947 = vmax.f32 %v939, 0.0
        %v948 = vmax.f32 %v940, 0.0
        %v949 = vadd.f32 %v941, %v942
        %v950 = vadd.f32 %v949, %v943
        %v951 = vadd.f32 %v950, %v944
        %v952 = vadd.f32 %v951, %v945
        %v953 = vadd.f32 %v952, %v946
        %v954 = vadd.f32 %v953, %v947
        %v955 = vadd.f32 %v954, %v948
        %v956 = vrot.slane %v955, 4
        %v957 = vadd.f32 %v955, %v956
        %v958 = vrot.slane %v957, 2
        %v959 = vadd.f32 %v957, %v958
        %v960 = vrot.slane %v959, 1
        %v961 = vadd.f32 %v959, %v960
        %v962 = vrcp.pop 64.0
        %v963 = vmul.f32 64.0, %v962
        %v964 = vsub.f32 1.0, %v963
        %v965 = vmul.f32 %v962, %v964
        %v966 = vadd.f32 %v962, %v965
        %vm967 = vweird.f32 %v962
        %v968 = vsel %vm967, %v962, %v966
        %v969 = vmul.f32 %v961, %v968
        %970 = vst [vmem:[%s162] sm:$0x1] %v969
        %s971 = sand.u32 %s93, 1
        %s972 = scalar_lea.sflag [#allocation3], %s971
        %s973 = sand.u32 %s93, 1
        %s974 = scalar_lea.vmem [#allocation2], %s973
        // Predicated region
        $region33: #{tpu_custom_call.1} parent=31 // pred_check
          %p975 = pneg %p103
        $region34: #{tpu_custom_call.1} parent=31 // pred_check_branch
          %977 = sbr.rel (%p975) target = $region36
        $region35: #{tpu_custom_call.1} parent=31 // pred_region
          %979 = vsyncadd %s972, 0
          %s980 = scalar_lea.hbm %s3, %s17
          %s982 = sshll.u32 %s974, 4
          %s983 = int_to_ptr.vmem [resolvable:$true] %s982
          %s984 = sshll.u32 %s980, 4
          %s985 = int_to_ptr.hbm [resolvable:$true] %s984
          %987 = dma.vmem_to_hbm [thread:$0]  %s983, 16, %s985, %s972
        $region36: #{tpu_custom_call.1} parent=31 // pred_fallthru
          _
      $region32: #{tpu_custom_call.1} parent=5 // pred_fallthru
        _
      %p988 = scmp.le.s32.totalorder 2, %s12
      // Predicated region
      $region37: #{tpu_custom_call.1} parent=5 // pred_check
        %p989 = pneg %p988
      $region38: #{tpu_custom_call.1} parent=5 // pred_check_branch
        %991 = sbr.rel (%p989) target = $region40
      $region39: #{tpu_custom_call.1} parent=5 // pred_region
        %s992 = ssub.s32 %s12, 2
        // Predicated region
        $region41: #{tpu_custom_call.1} parent=39 // pred_check
          %p993 = pneg %p109
        $region42: #{tpu_custom_call.1} parent=39 // pred_check_branch
          %995 = sbr.rel (%p993) target = $region44
        $region43: #{tpu_custom_call.1} parent=39 // pred_region
          %s996 = sand.u32 %s94, 1
          %s997 = scalar_lea.sflag [#allocation3], %s996
          %s998 = sand.u32 %s94, 1
          %s999 = scalar_lea.vmem [#allocation2], %s998
          %1001 = dma.done %s997, 16
        $region44: #{tpu_custom_call.1} parent=39 // pred_fallthru
          _
      $region40: #{tpu_custom_call.1} parent=5 // pred_fallthru
        _
    $region6: #{tpu_custom_call.1} parent=1 // loop_footer
      %s16 = sadd.s32 1, %s12
    $region7: #{tpu_custom_call.1} parent=1 // loop_footer_branch
      %11 = sbr.rel target = $region3
    $region8: #{tpu_custom_call.1} parent=1 // loop_exit
      _
    %1002 = vsyncpa [#allocation3], 1
    %s1003 = scalar_lea.sflag [#allocation3], 1
    %1004 = vsyncpa %s1003, 1

</llo_original>
